<compile_context>
chip_gen: v5e
topology: v5e:2x2
jax: 0.10.0
libtpu: 0.0.40
codegen_flags: <defaults>
</compile_context>

<pallas_src>
import functools

import jax
import jax.numpy as jnp
from jax.experimental import pallas as pl
from jax.experimental.pallas import tpu as pltpu


def hnn_symplectic_kernel(x_ref, w1_ref, bias_ref, w2_ref, w2ts_ref, w1s_ref,
                          o_ref):
    """Fused H-forward + manual backward + symplectic projection.

    All activations are [H, B_tile] (batch on lanes); output is [2, B_tile].
    The final-layer bias b3 does not affect the gradient, so it is not passed.
    """
    x = x_ref[...]          # [2, Bt]   rows = (q, p), batch on lanes
    w1 = w1_ref[...]        # [H, 2]
    bias = bias_ref[...]    # [H, 2]    columns = (b1, b2)
    w2 = w2_ref[...]        # [H, H]
    w2ts = w2ts_ref[...]    # [H, H]  == w2.T * w3  (w3 folded in, wrapper-side)
    w1s = w1s_ref[...]      # [2, H]  == symplectic-swapped w1.T

    b1 = bias[:, 0:1]       # [H, 1]
    b2 = bias[:, 1:2]       # [H, 1]

    # ---- forward pass of the Hamiltonian MLP (feature-major, batch-lanes) ----
    # First layer: K=2 contraction done as two VPU broadcast-FMAs (MXU with a
    # contraction depth of 2 is almost entirely idle -> keep it off the MXU).
    z1 = w1[:, 0:1] * x[0:1, :] + w1[:, 1:2] * x[1:2, :] + b1        # [H, Bt]
    h1 = jnp.tanh(z1)
    z2 = jnp.dot(w2, h1, preferred_element_type=jnp.float32) + b2    # [H, Bt]
    h2 = jnp.tanh(z2)
    # y = w3.T @ h2 + b3 (scalar per sample) -- the value itself is not needed.

    # ---- manual backward: d(sum_b y_b)/dx, tanh' = 1 - tanh^2 ----
    # w3 is pre-folded into w2ts, so the first backward step is a single matmul.
    g1 = jnp.dot(w2ts, 1.0 - h2 * h2,
                 preferred_element_type=jnp.float32)                 # [H, Bt]
    d1 = g1 * (1.0 - h1 * h1)                                        # [H, Bt]

    # ---- final projection with the symplectic swap folded into the weights ----
    # row 0 = dH/dp, row 1 = -dH/dq  -> output tile produced directly by the MXU.
    o_ref[...] = jnp.dot(w1s, d1,
                         preferred_element_type=jnp.float32).astype(o_ref.dtype)


def _pick_batch_tile(B, b_tile):
    """Choose the lane-axis batch tile (multiple of 128) and block count."""
    full = 128 * ((B + 127) // 128)              # padded batch if single tile
    bt = max(128, min((b_tile // 128) * 128, full))
    n = (B + bt - 1) // bt
    # v7x megacore: prefer an even number (>= 2) of grid steps so the
    # "parallel" axis shards across both TensorCores; harmless on v5e/v6e.
    if (n < 2 or n % 2 == 1) and bt > 128:
        half = max(128, ((bt // 2) // 128) * 128)
        n_half = (B + half - 1) // half
        if n_half >= 2 and n_half % 2 == 0:
            bt, n = half, n_half
    return bt, n


@functools.partial(jax.jit, static_argnames=("b_tile",))
def hnn_mass_spring_separable(x, w1, b1, w2, b2, w3, *, b_tile=2048):
    """x: [B, 2] (q, p); weights in PyTorch nn.Linear convention ([out, in]).

    Returns [B, 2] = [dH/dp, -dH/dq].
    """
    B = x.shape[0]
    H = w1.shape[0]

    # --- one-time wrapper-side layout work (fused under this jit) ---
    w1_f = w1.astype(jnp.float32)                              # [H, 2]
    w2_f = w2.astype(jnp.float32)                              # [H, H]
    w3_row = w3.astype(jnp.float32).reshape(1, H)              # [1, H]
    w2_t_scaled = w2_f.T * w3_row                              # [H, H] = w2.T*diag(w3)
    bias_pack = jnp.stack([b1.astype(jnp.float32).reshape(H),
                           b2.astype(jnp.float32).reshape(H)], axis=1)  # [H, 2]
    # Symplectic swap folded into the final projection: out = w1_sym @ d1.
    w1_sym = jnp.stack([w1_f[:, 1], -w1_f[:, 0]], axis=0)      # [2, H]

    # --- batch tiling: batch goes on the lane axis, tile multiple of 128 ---
    bt, n_blocks = _pick_batch_tile(B, b_tile)
    b_pad = n_blocks * bt

    x_t = jnp.pad(x.astype(jnp.float32), ((0, b_pad - B), (0, 0))).T  # [2, b_pad]

    const = lambda i: (0, 0)
    out_t = pl.pallas_call(
        hnn_symplectic_kernel,
        out_shape=jax.ShapeDtypeStruct((2, b_pad), jnp.float32),
        grid=(n_blocks,),
        in_specs=[
            pl.BlockSpec((2, bt), lambda i: (0, i)),    # x      (batch-blocked)
            pl.BlockSpec((H, 2), const),                # w1     (resident)
            pl.BlockSpec((H, 2), const),                # b1|b2  (packed, resident)
            pl.BlockSpec((H, H), const),                # w2
            pl.BlockSpec((H, H), const),                # w2.T * w3
            pl.BlockSpec((2, H), const),                # w1_sym
        ],
        out_specs=pl.BlockSpec((2, bt), lambda i: (0, i)),
        compiler_params=pltpu.CompilerParams(
            dimension_semantics=("parallel",)),         # megacore on v7x
    )(x_t, w1_f, bias_pack, w2_f, w2_t_scaled, w1_sym)

    return out_t.T[:B].astype(x.dtype)


def _hamiltonian_ref(x, w1, b1, w2, b2, w3, b3):
    """Pure-JAX Hamiltonian (for reference gradient via jax.grad)."""
    h1 = jnp.tanh(x @ w1.T + b1[0])
    h2 = jnp.tanh(h1 @ w2.T + b2[0])
    return (h2 @ w3.T + b3)[..., 0]


if __name__ == "__main__":
    key = jax.random.PRNGKey(0)
    B, HID = 8, 32  # dim = 1  ->  x = (q, p) per sample, shape [B, 2]

    k = jax.random.split(key, 8)
    # Deterministic synthetic parameters (uniform, nn.Linear-style scaling).
    w1 = jax.random.uniform(k[0], (HID, 2), jnp.float32, -0.7, 0.7)
    b1 = jax.random.uniform(k[1], (1, HID), jnp.float32, -0.7, 0.7)
    w2 = jax.random.uniform(k[2], (HID, HID), jnp.float32, -0.17, 0.17)
    b2 = jax.random.uniform(k[3], (1, HID), jnp.float32, -0.17, 0.17)
    w3 = jax.random.uniform(k[4], (1, HID), jnp.float32, -0.17, 0.17)
    b3 = jax.random.uniform(k[5], (1,), jnp.float32, -0.17, 0.17)

    x = jax.random.normal(k[6], (B, 2), jnp.float32)

    out = hnn_mass_spring_separable(x, w1, b1, w2, b2, w3)
    out = jax.block_until_ready(out)

    # Reference: autodiff of the Hamiltonian, then symplectic rearrange.
    dH = jax.grad(lambda xx: _hamiltonian_ref(xx, w1, b1, w2, b2, w3, b3).sum())(x)
    ref = jnp.concatenate([dH[:, 1:2], -dH[:, 0:1]], axis=1)
    assert out.shape == (B, 2) and out.dtype == x.dtype
    assert jnp.allclose(out, ref, atol=1e-4, rtol=1e-4)

    print("KERNEL_OK")
</pallas_src>

<mosaic_0001>
module attributes {stable_mosaic.version = 11 : i64} {
  func.func @hnn_symplectic_kernel(%arg0: i32, %arg1: memref<2x128xf32, #tpu.memory_space<vmem>>, %arg2: memref<32x2xf32, #tpu.memory_space<vmem>>, %arg3: memref<32x2xf32, #tpu.memory_space<vmem>>, %arg4: memref<32x32xf32, #tpu.memory_space<vmem>>, %arg5: memref<32x32xf32, #tpu.memory_space<vmem>>, %arg6: memref<2x32xf32, #tpu.memory_space<vmem>>, %arg7: memref<2x128xf32, #tpu.memory_space<vmem>>) attributes {dimension_semantics = [#tpu.dimension_semantics<parallel>], iteration_bounds = array<i64: 1>, scalar_prefetch = 0 : i64, scratch_operands = 0 : i64, tpu.core_type = #tpu.core_type<tc>, window_params = [{transform_indices = @transform_0, window_bounds = array<i64: 2, 128>}, {pipeline_mode = #tpu.pipeline_mode<synchronous>, transform_indices = @transform_1, window_bounds = array<i64: 32, 2>}, {pipeline_mode = #tpu.pipeline_mode<synchronous>, transform_indices = @transform_2, window_bounds = array<i64: 32, 2>}, {pipeline_mode = #tpu.pipeline_mode<synchronous>, transform_indices = @transform_3, window_bounds = array<i64: 32, 32>}, {pipeline_mode = #tpu.pipeline_mode<synchronous>, transform_indices = @transform_4, window_bounds = array<i64: 32, 32>}, {pipeline_mode = #tpu.pipeline_mode<synchronous>, transform_indices = @transform_5, window_bounds = array<i64: 2, 32>}, {transform_indices = @transform_6, window_bounds = array<i64: 2, 128>}]} {
    %c0 = arith.constant 0 : index
    %c0_0 = arith.constant 0 : index
    %0 = vector.load %arg1[%c0, %c0_0] : memref<2x128xf32, #tpu.memory_space<vmem>>, vector<2x128xf32>
    %c0_1 = arith.constant 0 : index
    %c0_2 = arith.constant 0 : index
    %1 = vector.load %arg2[%c0_1, %c0_2] : memref<32x2xf32, #tpu.memory_space<vmem>>, vector<32x2xf32>
    %c0_3 = arith.constant 0 : index
    %c0_4 = arith.constant 0 : index
    %2 = vector.load %arg3[%c0_3, %c0_4] : memref<32x2xf32, #tpu.memory_space<vmem>>, vector<32x2xf32>
    %c0_5 = arith.constant 0 : index
    %c0_6 = arith.constant 0 : index
    %3 = vector.load %arg4[%c0_5, %c0_6] : memref<32x32xf32, #tpu.memory_space<vmem>>, vector<32x32xf32>
    %c0_7 = arith.constant 0 : index
    %c0_8 = arith.constant 0 : index
    %4 = vector.load %arg5[%c0_7, %c0_8] : memref<32x32xf32, #tpu.memory_space<vmem>>, vector<32x32xf32>
    %c0_9 = arith.constant 0 : index
    %c0_10 = arith.constant 0 : index
    %5 = vector.load %arg6[%c0_9, %c0_10] : memref<2x32xf32, #tpu.memory_space<vmem>>, vector<2x32xf32>
    %6 = vector.extract_strided_slice %2 {offsets = [0, 0], sizes = [32, 1], strides = [1, 1]} : vector<32x2xf32> to vector<32x1xf32>
    %7 = vector.extract_strided_slice %2 {offsets = [0, 1], sizes = [32, 1], strides = [1, 1]} : vector<32x2xf32> to vector<32x1xf32>
    %8 = vector.extract_strided_slice %1 {offsets = [0, 0], sizes = [32, 1], strides = [1, 1]} : vector<32x2xf32> to vector<32x1xf32>
    %9 = vector.extract_strided_slice %0 {offsets = [0, 0], sizes = [1, 128], strides = [1, 1]} : vector<2x128xf32> to vector<1x128xf32>
    %10 = vector.broadcast %8 : vector<32x1xf32> to vector<32x128xf32>
    %11 = vector.broadcast %9 : vector<1x128xf32> to vector<32x128xf32>
    %12 = arith.mulf %10, %11 : vector<32x128xf32>
    %13 = vector.extract_strided_slice %1 {offsets = [0, 1], sizes = [32, 1], strides = [1, 1]} : vector<32x2xf32> to vector<32x1xf32>
    %14 = vector.extract_strided_slice %0 {offsets = [1, 0], sizes = [1, 128], strides = [1, 1]} : vector<2x128xf32> to vector<1x128xf32>
    %15 = vector.broadcast %13 : vector<32x1xf32> to vector<32x128xf32>
    %16 = vector.broadcast %14 : vector<1x128xf32> to vector<32x128xf32>
    %17 = arith.mulf %15, %16 : vector<32x128xf32>
    %18 = arith.addf %12, %17 : vector<32x128xf32>
    %19 = vector.broadcast %6 : vector<32x1xf32> to vector<32x128xf32>
    %20 = arith.addf %18, %19 : vector<32x128xf32>
    %21 = math.tanh %20 : vector<32x128xf32>
    %cst = arith.constant dense<0.000000e+00> : vector<32x128xf32>
    %22 = tpu.matmul %3, %21, %cst {dimension_numbers = #tpu.dot_dimension_numbers<[1], [0], [0], [1], [0, 0, 1, 1], [], []>} : vector<32x32xf32>, vector<32x128xf32>, vector<32x128xf32> -> vector<32x128xf32>
    %23 = vector.broadcast %7 : vector<32x1xf32> to vector<32x128xf32>
    %24 = arith.addf %22, %23 : vector<32x128xf32>
    %25 = math.tanh %24 : vector<32x128xf32>
    %26 = arith.mulf %25, %25 : vector<32x128xf32>
    %cst_11 = arith.constant 1.000000e+00 : f32
    %27 = vector.broadcast %cst_11 : f32 to vector<32x128xf32>
    %28 = arith.subf %27, %26 : vector<32x128xf32>
    %cst_12 = arith.constant dense<0.000000e+00> : vector<32x128xf32>
    %29 = tpu.matmul %4, %28, %cst_12 {dimension_numbers = #tpu.dot_dimension_numbers<[1], [0], [0], [1], [0, 0, 1, 1], [], []>} : vector<32x32xf32>, vector<32x128xf32>, vector<32x128xf32> -> vector<32x128xf32>
    %30 = arith.mulf %21, %21 : vector<32x128xf32>
    %cst_13 = arith.constant 1.000000e+00 : f32
    %31 = vector.broadcast %cst_13 : f32 to vector<32x128xf32>
    %32 = arith.subf %31, %30 : vector<32x128xf32>
    %33 = arith.mulf %29, %32 : vector<32x128xf32>
    %cst_14 = arith.constant dense<0.000000e+00> : vector<2x128xf32>
    %34 = tpu.matmul %5, %33, %cst_14 {dimension_numbers = #tpu.dot_dimension_numbers<[1], [0], [0], [1], [0, 0, 1, 1], [], []>} : vector<2x32xf32>, vector<32x128xf32>, vector<2x128xf32> -> vector<2x128xf32>
    %c0_15 = arith.constant 0 : index
    %c0_16 = arith.constant 0 : index
    %35 = vector.load %arg7[%c0_15, %c0_16] : memref<2x128xf32, #tpu.memory_space<vmem>>, vector<2x128xf32>
    tpu.vector_store %arg7[%c0_15, %c0_16], %34 {strides = array<i32>} : memref<2x128xf32, #tpu.memory_space<vmem>>, vector<2x128xf32>,
    return
  }
  func.func @transform_0(%arg0: i32) -> (i32, i32) {
    %c0_i32 = arith.constant 0 : i32
    %c0_i32_0 = arith.constant 0 : i32
    return %c0_i32, %arg0 : i32, i32
  }
  func.func @transform_1(%arg0: i32) -> (i32, i32) {
    %c0_i32 = arith.constant 0 : i32
    %c0_i32_0 = arith.constant 0 : i32
    %c0_i32_1 = arith.constant 0 : i32
    return %c0_i32, %c0_i32_0 : i32, i32
  }
  func.func @transform_2(%arg0: i32) -> (i32, i32) {
    %c0_i32 = arith.constant 0 : i32
    %c0_i32_0 = arith.constant 0 : i32
    %c0_i32_1 = arith.constant 0 : i32
    return %c0_i32, %c0_i32_0 : i32, i32
  }
  func.func @transform_3(%arg0: i32) -> (i32, i32) {
    %c0_i32 = arith.constant 0 : i32
    %c0_i32_0 = arith.constant 0 : i32
    %c0_i32_1 = arith.constant 0 : i32
    return %c0_i32, %c0_i32_0 : i32, i32
  }
  func.func @transform_4(%arg0: i32) -> (i32, i32) {
    %c0_i32 = arith.constant 0 : i32
    %c0_i32_0 = arith.constant 0 : i32
    %c0_i32_1 = arith.constant 0 : i32
    return %c0_i32, %c0_i32_0 : i32, i32
  }
  func.func @transform_5(%arg0: i32) -> (i32, i32) {
    %c0_i32 = arith.constant 0 : i32
    %c0_i32_0 = arith.constant 0 : i32
    %c0_i32_1 = arith.constant 0 : i32
    return %c0_i32, %c0_i32_0 : i32, i32
  }
  func.func @transform_6(%arg0: i32) -> (i32, i32) {
    %c0_i32 = arith.constant 0 : i32
    %c0_i32_0 = arith.constant 0 : i32
    return %c0_i32, %arg0 : i32, i32
  }
}

</mosaic_0001>

<llo_original>
// kernel: hnn_mass_spring_separable.1
$region0: #{hnn_mass_spring_separable.1}
  #allocation0 [shape = 'u32[]', space=smem, size = 0x4, offset = 0x4, fixed_abs, tag = 'smem constant byte address 0x4 - core index']
  #allocation1 [shape = 'u32[72,128]{1,0:T(1,128)}', space=vmem, size = 0x9000, scoped, tag = 'internal scratch']
  %s0 = inlined_call_operand.vmem [shape: f32[2,128], index: 0, kind: input, shape index: {}]
  %s1 = inlined_call_operand.vmem [shape: f32[32,2], index: 1, kind: input, shape index: {}]
  %s2 = inlined_call_operand.vmem [shape: f32[32,2], index: 2, kind: input, shape index: {}]
  %s3 = inlined_call_operand.vmem [shape: f32[32,32], index: 3, kind: input, shape index: {}]
  %s4 = inlined_call_operand.vmem [shape: f32[32,32], index: 4, kind: input, shape index: {}]
  %s5 = inlined_call_operand.vmem [shape: f32[2,32], index: 5, kind: input, shape index: {}]
  %s6 = inlined_call_operand.hbm [shape: f32[2,128], index: 6, kind: output, shape index: {}]
  %s7 = sld [smem:[#allocation0]]
  $region34: #{hnn_mass_spring_separable.1} parent=0
    _
  %s9 = ssub.s32 1, %s7
  %s10 = scalar_select 0, %s9, %s7
  $region1: #{hnn_mass_spring_separable.1} parent=0
    #allocation2 [shape = 'u8[1024]{0}', space=vmem, size = 0x400, scoped, tag = 'output window, operand 0, single buffered']
    #allocation3 [shape = 's32[1]{0}', space=sflag, size = 0x4, scoped, tag = 'scoped memory for hnn_mass_spring_separable.1']
    %11 = vsyncpa [#allocation3], 0
    // Predicated region
    $region2: #{hnn_mass_spring_separable.1} parent=1 // pred_check
      _
    $region3: #{hnn_mass_spring_separable.1} parent=1 // pred_check_branch
      %13 = sbr.rel (0) target = $region5
    $region4: #{hnn_mass_spring_separable.1} parent=1 // pred_region
      _
    $region5: #{hnn_mass_spring_separable.1} parent=1 // pred_fallthru
      _
    // Predicated region
    $region6: #{hnn_mass_spring_separable.1} parent=1 // pred_check
      _
    $region7: #{hnn_mass_spring_separable.1} parent=1 // pred_check_branch
      %15 = sbr.rel (0) target = $region9
    $region8: #{hnn_mass_spring_separable.1} parent=1 // pred_region
      _
    $region9: #{hnn_mass_spring_separable.1} parent=1 // pred_fallthru
      _
    // Predicated region
    $region10: #{hnn_mass_spring_separable.1} parent=1 // pred_check
      _
    $region11: #{hnn_mass_spring_separable.1} parent=1 // pred_check_branch
      %17 = sbr.rel (0) target = $region13
    $region12: #{hnn_mass_spring_separable.1} parent=1 // pred_region
      _
    $region13: #{hnn_mass_spring_separable.1} parent=1 // pred_fallthru
      _
    // Predicated region
    $region14: #{hnn_mass_spring_separable.1} parent=1 // pred_check
      _
    $region15: #{hnn_mass_spring_separable.1} parent=1 // pred_check_branch
      %19 = sbr.rel (0) target = $region17
    $region16: #{hnn_mass_spring_separable.1} parent=1 // pred_region
      _
    $region17: #{hnn_mass_spring_separable.1} parent=1 // pred_fallthru
      _
    // Predicated region
    $region18: #{hnn_mass_spring_separable.1} parent=1 // pred_check
      _
    $region19: #{hnn_mass_spring_separable.1} parent=1 // pred_check_branch
      %21 = sbr.rel (0) target = $region21
    $region20: #{hnn_mass_spring_separable.1} parent=1 // pred_region
      _
    $region21: #{hnn_mass_spring_separable.1} parent=1 // pred_fallthru
      _
    // Predicated region
    $region22: #{hnn_mass_spring_separable.1} parent=1 // pred_check
      _
    $region23: #{hnn_mass_spring_separable.1} parent=1 // pred_check_branch
      %23 = sbr.rel (0) target = $region25
    $region24: #{hnn_mass_spring_separable.1} parent=1 // pred_region
      _
    $region25: #{hnn_mass_spring_separable.1} parent=1 // pred_fallthru
      _
    %v24 = vld [vmem:[%s0] sm:$0x3]
    %v25 = vld [vmem:[%s1] sm:$0xff]
    %v26 = vld [vmem:[%s1 + $0x8] sm:$0xff]
    %v27 = vld [vmem:[%s1 + $0x10] sm:$0xff]
    %v28 = vld [vmem:[%s1 + $0x18] sm:$0xff]
    %v29 = vld [vmem:[%s2] sm:$0xff]
    %v30 = vld [vmem:[%s2 + $0x8] sm:$0xff]
    %v31 = vld [vmem:[%s2 + $0x10] sm:$0xff]
    %v32 = vld [vmem:[%s2 + $0x18] sm:$0xff]
    %v33 = vld [vmem:[%s3] sm:$0xff]
    %v34 = vld [vmem:[%s3 + $0x8] sm:$0xff]
    %v35 = vld [vmem:[%s3 + $0x10] sm:$0xff]
    %v36 = vld [vmem:[%s3 + $0x18] sm:$0xff]
    %v37 = vld [vmem:[%s4] sm:$0xff]
    %v38 = vld [vmem:[%s4 + $0x8] sm:$0xff]
    %v39 = vld [vmem:[%s4 + $0x10] sm:$0xff]
    %v40 = vld [vmem:[%s4 + $0x18] sm:$0xff]
    %v41 = vld [vmem:[%s5] sm:$0x3]
    %43 = vset.pattern.permute.xlu0 0
    %44 = vperm.xlu0 %43, %v25
    %v45 = vpop.permute.xlu0 %44
    %48 = vset.pattern.permute.xlu0 0
    %49 = vperm.xlu0 %48, %v26
    %v50 = vpop.permute.xlu0 %49
    %53 = vset.pattern.permute.xlu0 0
    %54 = vperm.xlu0 %53, %v27
    %v55 = vpop.permute.xlu0 %54
    %58 = vset.pattern.permute.xlu0 0
    %59 = vperm.xlu0 %58, %v28
    %v60 = vpop.permute.xlu0 %59
    %v62 = vperm.slane %v24, 0
    %v63 = vmul.f32 %v45, %v62
    %v64 = vmul.f32 %v50, %v62
    %v65 = vmul.f32 %v55, %v62
    %v66 = vmul.f32 %v60, %v62
    %67 = vset.pattern.permute.xlu0 1
    %68 = vperm.xlu0 %67, %v25
    %v69 = vpop.permute.xlu0 %68
    %71 = vset.pattern.permute.xlu0 1
    %72 = vperm.xlu0 %71, %v26
    %v73 = vpop.permute.xlu0 %72
    %75 = vset.pattern.permute.xlu0 1
    %76 = vperm.xlu0 %75, %v27
    %v77 = vpop.permute.xlu0 %76
    %79 = vset.pattern.permute.xlu0 1
    %80 = vperm.xlu0 %79, %v28
    %v81 = vpop.permute.xlu0 %80
    %v83 = vperm.slane %v24, 1
    %v84 = vmul.f32 %v69, %v83
    %v85 = vmul.f32 %v73, %v83
    %v86 = vmul.f32 %v77, %v83
    %v87 = vmul.f32 %v81, %v83
    %v88 = vadd.f32 %v63, %v84
    %v89 = vadd.f32 %v64, %v85
    %v90 = vadd.f32 %v65, %v86
    %v91 = vadd.f32 %v66, %v87
    %93 = vset.pattern.permute.xlu0 0
    %94 = vperm.xlu0 %93, %v29
    %v95 = vpop.permute.xlu0 %94
    %98 = vset.pattern.permute.xlu0 0
    %99 = vperm.xlu0 %98, %v30
    %v100 = vpop.permute.xlu0 %99
    %103 = vset.pattern.permute.xlu0 0
    %104 = vperm.xlu0 %103, %v31
    %v105 = vpop.permute.xlu0 %104
    %108 = vset.pattern.permute.xlu0 0
    %109 = vperm.xlu0 %108, %v32
    %v110 = vpop.permute.xlu0 %109
    %v112 = vadd.f32 %v88, %v95
    %v113 = vadd.f32 %v89, %v100
    %v114 = vadd.f32 %v90, %v105
    %v115 = vadd.f32 %v91, %v110
    %v116 = vtanh.pop %v112
    %v117 = vtanh.pop %v113
    %v118 = vtanh.pop %v114
    %v119 = vtanh.pop %v115
    %120 = vset.pattern.permute.xlu0 1
    %121 = vperm.xlu0 %120, %v29
    %v122 = vpop.permute.xlu0 %121
    %124 = vset.pattern.permute.xlu0 1
    %125 = vperm.xlu0 %124, %v30
    %v126 = vpop.permute.xlu0 %125
    %128 = vset.pattern.permute.xlu0 1
    %129 = vperm.xlu0 %128, %v31
    %v130 = vpop.permute.xlu0 %129
    %132 = vset.pattern.permute.xlu0 1
    %133 = vperm.xlu0 %132, %v32
    %v134 = vpop.permute.xlu0 %133
    %vm136 = vcmask 261120
    %v138 = vsel %vm136, %v33, 0
    %v141 = vsel %vm136, %v34, 0
    %v144 = vsel %vm136, %v35, 0
    %v147 = vsel %vm136, %v36, 0
    %149 = vmatpush.msra.mxu0 0.0
    %150 = vmatpush.msra.mxu0 0.0
    %151 = vmatpush.msra.mxu0 0.0
    %152 = vmatpush.msra.mxu0 0.0
    %153 = vmatpush.msra.mxu0 0.0
    %154 = vmatpush.msra.mxu0 0.0
    %155 = vmatpush.msra.mxu0 0.0
    %156 = vmatpush.msra.mxu0 0.0
    %157 = vmatpush.msra.mxu0 0.0
    %158 = vmatpush.msra.mxu0 0.0
    %159 = vmatpush.msra.mxu0 0.0
    %160 = vmatpush.msra.mxu0 0.0
    %161 = vmatpush.msra.mxu0 %v119
    %162 = vmatpush.msra.mxu0 %v118
    %163 = vmatpush.msra.mxu0 %v117
    %164 = vmatpush.msra.mxu0 %v116
    %165 = vmatmul.f32.gmra.mxu0 %v138
    %v166 = vpop.f32.mrf.mxu0
    %v167 = vadd.f32 %v122, %v166
    %168 = vmatmul.f32.gmra.mxu0 %v141
    %v169 = vpop.f32.mrf.mxu0
    %v170 = vadd.f32 %v126, %v169
    %171 = vmatmul.f32.gmra.mxu0 %v144
    %v172 = vpop.f32.mrf.mxu0
    %v173 = vadd.f32 %v130, %v172
    %174 = vmatmul.f32.gmra.mxu0 %v147
    %v175 = vpop.f32.mrf.mxu0
    %v176 = vadd.f32 %v134, %v175
    %177 = vdwg.mxu0
    %v178 = vtanh.pop %v167
    %v179 = vtanh.pop %v170
    %v180 = vtanh.pop %v173
    %v181 = vtanh.pop %v176
    %v182 = vmul.f32 %v178, %v178
    %v183 = vmul.f32 %v179, %v179
    %v184 = vmul.f32 %v180, %v180
    %v185 = vmul.f32 %v181, %v181
    %v186 = vsub.f32 1.0, %v182
    %v187 = vsub.f32 1.0, %v183
    %v188 = vsub.f32 1.0, %v184
    %v189 = vsub.f32 1.0, %v185
    %v191 = vsel %vm136, %v37, 0
    %v194 = vsel %vm136, %v38, 0
    %v197 = vsel %vm136, %v39, 0
    %v200 = vsel %vm136, %v40, 0
    %202 = vmatpush.msra.mxu0 0.0
    %203 = vmatpush.msra.mxu0 0.0
    %204 = vmatpush.msra.mxu0 0.0
    %205 = vmatpush.msra.mxu0 0.0
    %206 = vmatpush.msra.mxu0 0.0
    %207 = vmatpush.msra.mxu0 0.0
    %208 = vmatpush.msra.mxu0 0.0
    %209 = vmatpush.msra.mxu0 0.0
    %210 = vmatpush.msra.mxu0 0.0
    %211 = vmatpush.msra.mxu0 0.0
    %212 = vmatpush.msra.mxu0 0.0
    %213 = vmatpush.msra.mxu0 0.0
    %214 = vmatpush.msra.mxu0 %v189
    %215 = vmatpush.msra.mxu0 %v188
    %216 = vmatpush.msra.mxu0 %v187
    %217 = vmatpush.msra.mxu0 %v186
    %218 = vmatmul.f32.gmra.mxu0 %v191
    %v219 = vpop.f32.mrf.mxu0
    %v220 = vadd.f32 0.0, %v219
    %221 = vmatmul.f32.gmra.mxu0 %v194
    %v222 = vpop.f32.mrf.mxu0
    %v223 = vadd.f32 0.0, %v222
    %224 = vmatmul.f32.gmra.mxu0 %v197
    %v225 = vpop.f32.mrf.mxu0
    %v226 = vadd.f32 0.0, %v225
    %227 = vmatmul.f32.gmra.mxu0 %v200
    %v228 = vpop.f32.mrf.mxu0
    %v229 = vadd.f32 0.0, %v228
    %230 = vdwg.mxu0
    %v231 = vmul.f32 %v116, %v116
    %v232 = vmul.f32 %v117, %v117
    %v233 = vmul.f32 %v118, %v118
    %v234 = vmul.f32 %v119, %v119
    %v235 = vsub.f32 1.0, %v231
    %v236 = vsub.f32 1.0, %v232
    %v237 = vsub.f32 1.0, %v233
    %v238 = vsub.f32 1.0, %v234
    %v239 = vmul.f32 %v220, %v235
    %v240 = vmul.f32 %v223, %v236
    %v241 = vmul.f32 %v226, %v237
    %v242 = vmul.f32 %v229, %v238
    %v244 = vsel %vm136, %v41, 0
    %246 = vmatpush.msra.mxu0 0.0
    %247 = vmatpush.msra.mxu0 0.0
    %248 = vmatpush.msra.mxu0 0.0
    %249 = vmatpush.msra.mxu0 0.0
    %250 = vmatpush.msra.mxu0 0.0
    %251 = vmatpush.msra.mxu0 0.0
    %252 = vmatpush.msra.mxu0 0.0
    %253 = vmatpush.msra.mxu0 0.0
    %254 = vmatpush.msra.mxu0 0.0
    %255 = vmatpush.msra.mxu0 0.0
    %256 = vmatpush.msra.mxu0 0.0
    %257 = vmatpush.msra.mxu0 0.0
    %258 = vmatpush.msra.mxu0 %v242
    %259 = vmatpush.msra.mxu0 %v241
    %260 = vmatpush.msra.mxu0 %v240
    %261 = vmatpush.msra.mxu0 %v239
    %262 = vmatmul.f32.gmra.mxu0 %v244
    %v263 = vpop.f32.mrf.mxu0
    %v264 = vadd.f32 0.0, %v263
    %265 = vdwg.mxu0
    %266 = vst [vmem:[#allocation2] sm:$0x3] %v264
    // Predicated region
    $region26: #{hnn_mass_spring_separable.1} parent=1 // pred_check
      _
    $region27: #{hnn_mass_spring_separable.1} parent=1 // pred_check_branch
      %268 = sbr.rel (0) target = $region29
    $region28: #{hnn_mass_spring_separable.1} parent=1 // pred_region
      %270 = vsyncadd [#allocation3], 0
      %s272 = sshll.u32 [#allocation2], 4
      %s273 = int_to_ptr.vmem [resolvable:$true] %s272
      %s274 = sshll.u32 %s6, 4
      %s275 = int_to_ptr.hbm [resolvable:$true] %s274
      %277 = dma.vmem_to_hbm [thread:$0]  %s273, 32, %s275, [#allocation3]
    $region29: #{hnn_mass_spring_separable.1} parent=1 // pred_fallthru
      _
    // Predicated region
    $region30: #{hnn_mass_spring_separable.1} parent=1 // pred_check
      _
    $region31: #{hnn_mass_spring_separable.1} parent=1 // pred_check_branch
      %279 = sbr.rel (0) target = $region33
    $region32: #{hnn_mass_spring_separable.1} parent=1 // pred_region
      %281 = dma.done [#allocation3], 32
    $region33: #{hnn_mass_spring_separable.1} parent=1 // pred_fallthru
      _
    %282 = vsyncpa [#allocation3], 1

</llo_original>
